<compile_context>
chip_gen: v6e
topology: v6e:2x2x1
jax: 0.10.0
libtpu: 0.0.40
codegen_flags: <defaults>
</compile_context>

<pallas_src>
import functools

import jax
import jax.numpy as jnp
from jax.experimental import pallas as pl
from jax.experimental.pallas import tpu as pltpu

NEG_SLOPE = 0.01  # nn.LeakyReLU default negative_slope


def _mlp_kernel(num_layers, compute_dtype, x_ref, *refs):
    """Fused MLP forward: (Linear, LeakyReLU) * (L-1), Linear, Sigmoid.

    refs = (w1, b1, w2, b2, ..., wL, bL, out_ref)
    x arrives f32 and is cast to `compute_dtype` (bf16) on the VPU; weights are already
    `compute_dtype`, biases f32, matmuls accumulate in f32, elementwise math is f32.
    """
    out_ref = refs[-1]
    param_refs = refs[:-1]

    h = x_ref[...].astype(compute_dtype)  # in-kernel cast: no extra wrapper HBM pass
    for li in range(num_layers):
        w = param_refs[2 * li][...]          # compute_dtype, [in, out]
        b = param_refs[2 * li + 1][...]      # f32, (1, out) -> broadcasts over batch
        acc = jnp.dot(h, w, preferred_element_type=jnp.float32) + b
        if li < num_layers - 1:
            # LeakyReLU in f32: max(h, slope*h) == leaky_relu(h) for 0 < slope < 1.
            acc = jnp.maximum(acc, NEG_SLOPE * acc)
            h = acc.astype(compute_dtype)    # back to bf16 for the next MXU pass
        else:
            h = jax.nn.sigmoid(acc)          # final Sigmoid in f32 (EUP)
    out_ref[...] = h.astype(out_ref.dtype)   # bf16 lane-dense store


def _default_batch_tile(B):
    """Largest tile <= 512 that divides B, is a multiple of 8, and gives grid >= 2.

    Falls back to a single full-batch step (tile == B) for ragged batch sizes.
    """
    for t in range(min(512, B // 2), 7, -1):
        if B % t == 0 and t % 8 == 0:
            return t
    return B


def prepare_params(params, *, compute_dtype=jnp.bfloat16):
    """One-time parameter preprocessing (do NOT call per forward pass).

    params: list of (W [in, out], b [out]) float32 per Linear layer.
    Returns (flat_params, d_out) where flat_params = (W1, b1, ..., WL, bL) with weights in
    `compute_dtype`, biases f32 shaped (1, out), and the final layer zero-padded to a
    128-lane-multiple output width so the kernel's store path is unmasked / lane-dense.
    """
    d_out = params[-1][0].shape[1]
    d_pad = max(128, ((d_out + 127) // 128) * 128)

    Wf, bf = params[-1]
    Wf_pad = jnp.zeros((Wf.shape[0], d_pad), Wf.dtype).at[:, :d_out].set(Wf)
    bf_pad = jnp.zeros((d_pad,), bf.dtype).at[:d_out].set(bf)
    padded = list(params[:-1]) + [(Wf_pad, bf_pad)]

    flat = []
    for W, b in padded:
        flat.append(jnp.asarray(W, compute_dtype))
        flat.append(jnp.asarray(b, jnp.float32).reshape(1, -1))
    return tuple(flat), d_out


def discriminator_forward(x, flat_params, d_out, *, batch_tile=None,
                          compute_dtype=jnp.bfloat16):
    """Run the fused Discriminator forward pass.

    x:           [B, D_in] float32
    flat_params: output of prepare_params()
    Returns:     [B, d_out] in x.dtype (sigmoid output)
    """
    B, D_in = x.shape
    num_layers = len(flat_params) // 2
    d_pad = flat_params[-2].shape[1]

    if batch_tile is None:
        batch_tile = _default_batch_tile(B)
    assert B % batch_tile == 0, "batch must be divisible by batch_tile"
    assert batch_tile == B or batch_tile % 8 == 0, "batch_tile must be a multiple of 8"

    in_specs = [pl.BlockSpec((batch_tile, D_in), lambda i: (i, 0))]
    for li in range(num_layers):
        W = flat_params[2 * li]
        b = flat_params[2 * li + 1]
        # Grid-invariant params (index_map always (0,0)); tiny at these dims so default
        # buffering is fine.  TODO(synk): use pipeline_mode=pl.Buffered(1) if dims grow
        # (matters most on v7x's 64 MiB VMEM).
        in_specs.append(pl.BlockSpec(W.shape, lambda i: (0, 0)))
        in_specs.append(pl.BlockSpec(b.shape, lambda i: (0, 0)))

    kernel = functools.partial(_mlp_kernel, num_layers, compute_dtype)

    out_padded = pl.pallas_call(
        kernel,
        # bf16 output slab: lane-dense stores preserved, half the HBM writeback of f32.
        out_shape=jax.ShapeDtypeStruct((B, d_pad), jnp.bfloat16),
        grid=(B // batch_tile,),
        in_specs=in_specs,
        out_specs=pl.BlockSpec((batch_tile, d_pad), lambda i: (i, 0)),
        compiler_params=pltpu.CompilerParams(
            dimension_semantics=("parallel",),  # batch axis shards across TCs on v7x
        ),
    )(x, *flat_params)

    # Slice off the padded lanes and return in the input dtype (single fused XLA op).
    return out_padded[:, :d_out].astype(x.dtype)


def init_params(key, layer_spec):
    """Deterministic init matching the Linear shapes implied by `layers`.

    layer_spec: list of (in_dim, out_dim) like the PyTorch module's `layers` arg.
    Returns list of (W [in, out], b [out]) in float32.
    """
    params = []
    for (fan_in, fan_out) in layer_spec:
        key, kw, kb = jax.random.split(key, 3)
        bound = 1.0 / jnp.sqrt(fan_in)
        W = jax.random.uniform(kw, (fan_in, fan_out), jnp.float32, -bound, bound)
        b = jax.random.uniform(kb, (fan_out,), jnp.float32, -bound, bound)
        params.append((W, b))
    return params


def reference_forward_mixed(x, params, compute_dtype, out_dtype=jnp.bfloat16):
    """Reference mirroring the kernel's precision recipe (bf16 matmul, f32 math, bf16 store)."""
    h = x.astype(compute_dtype)
    for li, (W, b) in enumerate(params):
        acc = jnp.dot(h, W.astype(compute_dtype), preferred_element_type=jnp.float32) + b
        if li < len(params) - 1:
            acc = jnp.maximum(acc, NEG_SLOPE * acc)
            h = acc.astype(compute_dtype)
        else:
            h = jax.nn.sigmoid(acc).astype(out_dtype).astype(jnp.float32)
    return h


def reference_forward_f32(x, params):
    """Pure f32 reference matching the PyTorch module's semantics."""
    h = x
    for li, (W, b) in enumerate(params):
        h = h @ W + b
        if li < len(params) - 1:
            h = jnp.where(h > 0, h, NEG_SLOPE * h)
    return jax.nn.sigmoid(h)


if __name__ == "__main__":
    key = jax.random.PRNGKey(0)

    # Discriminator(layers=[(32, 64), (64, 32), (32, 1)])
    layer_spec = [(32, 64), (64, 32), (32, 1)]
    B = 64

    key, kx = jax.random.split(key)
    x = jax.random.normal(kx, (B, layer_spec[0][0]), jnp.float32)
    params = init_params(key, layer_spec)

    # One-time parameter preprocessing (pad/cast/reshape hoisted out of the forward path).
    flat_params, d_out = prepare_params(params)

    out = discriminator_forward(x, flat_params, d_out)
    out = jax.block_until_ready(out)

    ref_mixed = reference_forward_mixed(x, params, jnp.bfloat16)
    ref_f32 = reference_forward_f32(x, params)

    assert out.shape == (B, d_out)
    # Check against the same mixed-precision recipe (bf16 matmul + bf16 output store).
    assert jnp.allclose(out, ref_mixed, atol=8e-3), (
        f"max abs err vs mixed ref {jnp.max(jnp.abs(out - ref_mixed))}"
    )
    # Fidelity check against the pure-f32 (PyTorch-semantics) reference.
    # NOTE: bf16 weights/activations are a documented precision choice for this GAN head.
    assert jnp.allclose(out, ref_f32, atol=3e-2), (
        f"max abs err vs f32 ref {jnp.max(jnp.abs(out - ref_f32))}"
    )

    print("KERNEL_OK")
</pallas_src>

<mosaic_0001>
module attributes {stable_mosaic.version = 11 : i64} {
  func.func @_mlp_kernel(%arg0: i32, %arg1: memref<32x32xf32, #tpu.memory_space<vmem>>, %arg2: memref<32x64xbf16, #tpu.memory_space<vmem>>, %arg3: memref<1x64xf32, #tpu.memory_space<vmem>>, %arg4: memref<64x32xbf16, #tpu.memory_space<vmem>>, %arg5: memref<1x32xf32, #tpu.memory_space<vmem>>, %arg6: memref<32x128xbf16, #tpu.memory_space<vmem>>, %arg7: memref<1x128xf32, #tpu.memory_space<vmem>>, %arg8: memref<32x128xbf16, #tpu.memory_space<vmem>>) attributes {dimension_semantics = [#tpu.dimension_semantics<parallel>], iteration_bounds = array<i64: 2>, scalar_prefetch = 0 : i64, scratch_operands = 0 : i64, tpu.core_type = #tpu.core_type<tc>, window_params = [{transform_indices = @transform_0, window_bounds = array<i64: 32, 32>}, {pipeline_mode = #tpu.pipeline_mode<synchronous>, transform_indices = @transform_1, window_bounds = array<i64: 32, 64>}, {pipeline_mode = #tpu.pipeline_mode<synchronous>, transform_indices = @transform_2, window_bounds = array<i64: 1, 64>}, {pipeline_mode = #tpu.pipeline_mode<synchronous>, transform_indices = @transform_3, window_bounds = array<i64: 64, 32>}, {pipeline_mode = #tpu.pipeline_mode<synchronous>, transform_indices = @transform_4, window_bounds = array<i64: 1, 32>}, {pipeline_mode = #tpu.pipeline_mode<synchronous>, transform_indices = @transform_5, window_bounds = array<i64: 32, 128>}, {pipeline_mode = #tpu.pipeline_mode<synchronous>, transform_indices = @transform_6, window_bounds = array<i64: 1, 128>}, {transform_indices = @transform_7, window_bounds = array<i64: 32, 128>}]} {
    %c0 = arith.constant 0 : index
    %c0_0 = arith.constant 0 : index
    %0 = vector.load %arg1[%c0, %c0_0] : memref<32x32xf32, #tpu.memory_space<vmem>>, vector<32x32xf32>
    %1 = arith.truncf %0 : vector<32x32xf32> to vector<32x32xbf16>
    %c0_1 = arith.constant 0 : index
    %c0_2 = arith.constant 0 : index
    %2 = vector.load %arg2[%c0_1, %c0_2] : memref<32x64xbf16, #tpu.memory_space<vmem>>, vector<32x64xbf16>
    %c0_3 = arith.constant 0 : index
    %c0_4 = arith.constant 0 : index
    %3 = vector.load %arg3[%c0_3, %c0_4] : memref<1x64xf32, #tpu.memory_space<vmem>>, vector<1x64xf32>
    %cst = arith.constant dense<0.000000e+00> : vector<32x64xf32>
    %4 = tpu.matmul %1, %2, %cst {dimension_numbers = #tpu.dot_dimension_numbers<[1], [0], [0], [1], [0, 0, 1, 1], [], []>} : vector<32x32xbf16>, vector<32x64xbf16>, vector<32x64xf32> -> vector<32x64xf32>
    %5 = vector.broadcast %3 : vector<1x64xf32> to vector<32x64xf32>
    %6 = arith.addf %4, %5 : vector<32x64xf32>
    %cst_5 = arith.constant 0.00999999977 : f32
    %7 = vector.broadcast %cst_5 : f32 to vector<32x64xf32>
    %8 = arith.mulf %7, %6 : vector<32x64xf32>
    %9 = arith.maximumf %6, %8 : vector<32x64xf32>
    %10 = arith.truncf %9 : vector<32x64xf32> to vector<32x64xbf16>
    %c0_6 = arith.constant 0 : index
    %c0_7 = arith.constant 0 : index
    %11 = vector.load %arg4[%c0_6, %c0_7] : memref<64x32xbf16, #tpu.memory_space<vmem>>, vector<64x32xbf16>
    %c0_8 = arith.constant 0 : index
    %c0_9 = arith.constant 0 : index
    %12 = vector.load %arg5[%c0_8, %c0_9] : memref<1x32xf32, #tpu.memory_space<vmem>>, vector<1x32xf32>
    %cst_10 = arith.constant dense<0.000000e+00> : vector<32x32xf32>
    %13 = tpu.matmul %10, %11, %cst_10 {dimension_numbers = #tpu.dot_dimension_numbers<[1], [0], [0], [1], [0, 0, 1, 1], [], []>} : vector<32x64xbf16>, vector<64x32xbf16>, vector<32x32xf32> -> vector<32x32xf32>
    %14 = vector.broadcast %12 : vector<1x32xf32> to vector<32x32xf32>
    %15 = arith.addf %13, %14 : vector<32x32xf32>
    %cst_11 = arith.constant 0.00999999977 : f32
    %16 = vector.broadcast %cst_11 : f32 to vector<32x32xf32>
    %17 = arith.mulf %16, %15 : vector<32x32xf32>
    %18 = arith.maximumf %15, %17 : vector<32x32xf32>
    %19 = arith.truncf %18 : vector<32x32xf32> to vector<32x32xbf16>
    %c0_12 = arith.constant 0 : index
    %c0_13 = arith.constant 0 : index
    %20 = vector.load %arg6[%c0_12, %c0_13] : memref<32x128xbf16, #tpu.memory_space<vmem>>, vector<32x128xbf16>
    %c0_14 = arith.constant 0 : index
    %c0_15 = arith.constant 0 : index
    %21 = vector.load %arg7[%c0_14, %c0_15] : memref<1x128xf32, #tpu.memory_space<vmem>>, vector<1x128xf32>
    %cst_16 = arith.constant dense<0.000000e+00> : vector<32x128xf32>
    %22 = tpu.matmul %19, %20, %cst_16 {dimension_numbers = #tpu.dot_dimension_numbers<[1], [0], [0], [1], [0, 0, 1, 1], [], []>} : vector<32x32xbf16>, vector<32x128xbf16>, vector<32x128xf32> -> vector<32x128xf32>
    %23 = vector.broadcast %21 : vector<1x128xf32> to vector<32x128xf32>
    %24 = arith.addf %22, %23 : vector<32x128xf32>
    %25 = arith.negf %24 : vector<32x128xf32>
    %26 = math.exp %25 : vector<32x128xf32>
    %cst_17 = arith.constant 1.000000e+00 : f32
    %27 = vector.broadcast %cst_17 : f32 to vector<32x128xf32>
    %28 = arith.addf %27, %26 : vector<32x128xf32>
    %29 = arith.divf %27, %28 : vector<32x128xf32>
    %30 = arith.truncf %29 : vector<32x128xf32> to vector<32x128xbf16>
    %c0_18 = arith.constant 0 : index
    %c0_19 = arith.constant 0 : index
    %31 = vector.load %arg8[%c0_18, %c0_19] : memref<32x128xbf16, #tpu.memory_space<vmem>>, vector<32x128xbf16>
    tpu.vector_store %arg8[%c0_18, %c0_19], %30 {strides = array<i32>} : memref<32x128xbf16, #tpu.memory_space<vmem>>, vector<32x128xbf16>,
    return
  }
  func.func @transform_0(%arg0: i32) -> (i32, i32) {
    %c0_i32 = arith.constant 0 : i32
    %c0_i32_0 = arith.constant 0 : i32
    return %arg0, %c0_i32 : i32, i32
  }
  func.func @transform_1(%arg0: i32) -> (i32, i32) {
    %c0_i32 = arith.constant 0 : i32
    %c0_i32_0 = arith.constant 0 : i32
    %c0_i32_1 = arith.constant 0 : i32
    return %c0_i32, %c0_i32_0 : i32, i32
  }
  func.func @transform_2(%arg0: i32) -> (i32, i32) {
    %c0_i32 = arith.constant 0 : i32
    %c0_i32_0 = arith.constant 0 : i32
    %c0_i32_1 = arith.constant 0 : i32
    return %c0_i32, %c0_i32_0 : i32, i32
  }
  func.func @transform_3(%arg0: i32) -> (i32, i32) {
    %c0_i32 = arith.constant 0 : i32
    %c0_i32_0 = arith.constant 0 : i32
    %c0_i32_1 = arith.constant 0 : i32
    return %c0_i32, %c0_i32_0 : i32, i32
  }
  func.func @transform_4(%arg0: i32) -> (i32, i32) {
    %c0_i32 = arith.constant 0 : i32
    %c0_i32_0 = arith.constant 0 : i32
    %c0_i32_1 = arith.constant 0 : i32
    return %c0_i32, %c0_i32_0 : i32, i32
  }
  func.func @transform_5(%arg0: i32) -> (i32, i32) {
    %c0_i32 = arith.constant 0 : i32
    %c0_i32_0 = arith.constant 0 : i32
    %c0_i32_1 = arith.constant 0 : i32
    return %c0_i32, %c0_i32_0 : i32, i32
  }
  func.func @transform_6(%arg0: i32) -> (i32, i32) {
    %c0_i32 = arith.constant 0 : i32
    %c0_i32_0 = arith.constant 0 : i32
    %c0_i32_1 = arith.constant 0 : i32
    return %c0_i32, %c0_i32_0 : i32, i32
  }
  func.func @transform_7(%arg0: i32) -> (i32, i32) {
    %c0_i32 = arith.constant 0 : i32
    %c0_i32_0 = arith.constant 0 : i32
    return %arg0, %c0_i32 : i32, i32
  }
}

</mosaic_0001>

<llo_original>
// kernel: tpu_custom_call.1
$region0: #{tpu_custom_call.1}
  #allocation0 [shape = 'u32[]', space=smem, size = 0x4, offset = 0x4, fixed_abs, tag = 'smem constant byte address 0x4 - core index']
  #allocation1 [shape = 'u32[144,128]{1,0:T(1,128)}', space=vmem, size = 0x12000, scoped, tag = 'internal scratch']
  %s0 = inlined_call_operand.vmem [shape: f32[64,32], index: 0, kind: input, shape index: {}]
  %s1 = inlined_call_operand.vmem [shape: bf16[32,64], index: 1, kind: input, shape index: {}]
  %s2 = inlined_call_operand.vmem [shape: f32[1,64], index: 2, kind: input, shape index: {}]
  %s3 = inlined_call_operand.vmem [shape: bf16[64,32], index: 3, kind: input, shape index: {}]
  %s4 = inlined_call_operand.vmem [shape: f32[1,32], index: 4, kind: input, shape index: {}]
  %s5 = inlined_call_operand.vmem [shape: bf16[32,128], index: 5, kind: input, shape index: {}]
  %s6 = inlined_call_operand.vmem [shape: f32[1,128], index: 6, kind: input, shape index: {}]
  %s7 = inlined_call_operand.hbm [shape: bf16[64,128], index: 7, kind: output, shape index: {}]
  %s8 = sld [smem:[#allocation0]]
  $region61: #{tpu_custom_call.1} parent=0
    _
  %s10 = ssub.s32 1, %s8
  %s11 = scalar_select 0, %s10, %s8
  $region1: #{tpu_custom_call.1} parent=0
    #allocation2 [shape = 'u8[16384]{0}', space=vmem, size = 0x4000, scoped, tag = 'output window, operand 0']
    #allocation3 [shape = 's32[2]{0}', space=sflag, size = 0x8, scoped, tag = 'scoped memory for tpu_custom_call.1']
    %12 = vsyncpa [#allocation3], 0
    %s13 = scalar_lea.sflag [#allocation3], 1
    %14 = vsyncpa %s13, 0
    loop: start=0, step=1, limit=4
    $region2: #{tpu_custom_call.1} parent=1 // loop_pre_header
      _
    $region3: #{tpu_custom_call.1} parent=1 // loop_header
      %s16 = sphi 0, %s20
      %p17 = scmp.ge.s32.totalorder %s16, 4
      %s26 = sphi 0, %s28
      %s29 = sphi 0, %s26
      %s30 = sphi 0, %s29
      %s46 = sphi 0, %s30
      %s50 = sphi 0, %s50
      %s52 = sphi 0, %s50
      %s53 = sphi 0, %s52
      %s67 = sphi 0, %s53
      %s71 = sphi 0, %s71
      %s73 = sphi 0, %s71
      %s74 = sphi 0, %s73
      %s88 = sphi 0, %s74
      %s92 = sphi 0, %s92
      %s94 = sphi 0, %s92
      %s95 = sphi 0, %s94
      %s109 = sphi 0, %s95
      %s113 = sphi 0, %s113
      %s115 = sphi 0, %s113
      %s116 = sphi 0, %s115
      %s130 = sphi 0, %s116
      %s134 = sphi 0, %s134
      %s136 = sphi 0, %s134
      %s137 = sphi 0, %s136
      %s151 = sphi 0, %s137
      %s155 = sphi 0, %s155
      %s157 = sphi 0, %s155
      %s158 = sphi 0, %s157
      %s172 = sphi 0, %s158
      %s178 = sphi 0, %s180
      %s181 = sphi 0, %s178
      %s182 = sphi 0, %s181
      %s198 = sphi 0, %s182
    $region4: #{tpu_custom_call.1} parent=1 // loop_header_branch
      %19 = sbr.rel (%p17) target = $region8
    $region5: #{tpu_custom_call.1} parent=1 // loop_body
      %s21 = ssub.s32 %s16, 1
      %s22 = ssub.s32 %s16, 2
      %s23 = sadd.s32 %s16, 1
      %s24 = ssub.s32 %s16, %s23
      %p25 = scmp.eq.s32.totalorder %s24, 0
      %s27 = sadd.s32 %s26, 1
      %s28 = scalar_select %p25, %s26, %s27
      %p31 = pneg %p25
      %p32 = scmp.eq.s32.totalorder %s16, 1
      %p33 = por %p31, %p32
      %p34 = scmp.ne.s32.totalorder %s26, %s29
      %p35 = scmp.eq.s32.totalorder %s16, 0
      %p36 = por %p34, %p35
      %p37 = scmp.ne.s32.totalorder %s26, %s29
      %p38 = scmp.eq.s32.totalorder %s21, 1
      %p39 = por %p37, %p38
      %p40 = scmp.ne.s32.totalorder %s29, %s30
      %p41 = scmp.eq.s32.totalorder %s21, 0
      %p42 = por %p40, %p41
      %p43 = scmp.ne.s32.totalorder %s29, %s30
      %p44 = scmp.eq.s32.totalorder %s22, 1
      %p45 = por %p43, %p44
      %p47 = scmp.ne.s32.totalorder %s30, %s46
      %p48 = scmp.eq.s32.totalorder %s22, 0
      %p49 = por %p47, %p48
      %s51 = sadd.s32 %s50, 1
      %p54 = scmp.eq.s32.totalorder %s16, 1
      %p55 = scmp.ne.s32.totalorder %s50, %s52
      %p56 = scmp.eq.s32.totalorder %s16, 0
      %p57 = por %p55, %p56
      %p58 = scmp.ne.s32.totalorder %s50, %s52
      %p59 = scmp.eq.s32.totalorder %s21, 1
      %p60 = por %p58, %p59
      %p61 = scmp.ne.s32.totalorder %s52, %s53
      %p62 = scmp.eq.s32.totalorder %s21, 0
      %p63 = por %p61, %p62
      %p64 = scmp.ne.s32.totalorder %s52, %s53
      %p65 = scmp.eq.s32.totalorder %s22, 1
      %p66 = por %p64, %p65
      %p68 = scmp.ne.s32.totalorder %s53, %s67
      %p69 = scmp.eq.s32.totalorder %s22, 0
      %p70 = por %p68, %p69
      %s72 = sadd.s32 %s71, 1
      %p75 = scmp.eq.s32.totalorder %s16, 1
      %p76 = scmp.ne.s32.totalorder %s71, %s73
      %p77 = scmp.eq.s32.totalorder %s16, 0
      %p78 = por %p76, %p77
      %p79 = scmp.ne.s32.totalorder %s71, %s73
      %p80 = scmp.eq.s32.totalorder %s21, 1
      %p81 = por %p79, %p80
      %p82 = scmp.ne.s32.totalorder %s73, %s74
      %p83 = scmp.eq.s32.totalorder %s21, 0
      %p84 = por %p82, %p83
      %p85 = scmp.ne.s32.totalorder %s73, %s74
      %p86 = scmp.eq.s32.totalorder %s22, 1
      %p87 = por %p85, %p86
      %p89 = scmp.ne.s32.totalorder %s74, %s88
      %p90 = scmp.eq.s32.totalorder %s22, 0
      %p91 = por %p89, %p90
      %s93 = sadd.s32 %s92, 1
      %p96 = scmp.eq.s32.totalorder %s16, 1
      %p97 = scmp.ne.s32.totalorder %s92, %s94
      %p98 = scmp.eq.s32.totalorder %s16, 0
      %p99 = por %p97, %p98
      %p100 = scmp.ne.s32.totalorder %s92, %s94
      %p101 = scmp.eq.s32.totalorder %s21, 1
      %p102 = por %p100, %p101
      %p103 = scmp.ne.s32.totalorder %s94, %s95
      %p104 = scmp.eq.s32.totalorder %s21, 0
      %p105 = por %p103, %p104
      %p106 = scmp.ne.s32.totalorder %s94, %s95
      %p107 = scmp.eq.s32.totalorder %s22, 1
      %p108 = por %p106, %p107
      %p110 = scmp.ne.s32.totalorder %s95, %s109
      %p111 = scmp.eq.s32.totalorder %s22, 0
      %p112 = por %p110, %p111
      %s114 = sadd.s32 %s113, 1
      %p117 = scmp.eq.s32.totalorder %s16, 1
      %p118 = scmp.ne.s32.totalorder %s113, %s115
      %p119 = scmp.eq.s32.totalorder %s16, 0
      %p120 = por %p118, %p119
      %p121 = scmp.ne.s32.totalorder %s113, %s115
      %p122 = scmp.eq.s32.totalorder %s21, 1
      %p123 = por %p121, %p122
      %p124 = scmp.ne.s32.totalorder %s115, %s116
      %p125 = scmp.eq.s32.totalorder %s21, 0
      %p126 = por %p124, %p125
      %p127 = scmp.ne.s32.totalorder %s115, %s116
      %p128 = scmp.eq.s32.totalorder %s22, 1
      %p129 = por %p127, %p128
      %p131 = scmp.ne.s32.totalorder %s116, %s130
      %p132 = scmp.eq.s32.totalorder %s22, 0
      %p133 = por %p131, %p132
      %s135 = sadd.s32 %s134, 1
      %p138 = scmp.eq.s32.totalorder %s16, 1
      %p139 = scmp.ne.s32.totalorder %s134, %s136
      %p140 = scmp.eq.s32.totalorder %s16, 0
      %p141 = por %p139, %p140
      %p142 = scmp.ne.s32.totalorder %s134, %s136
      %p143 = scmp.eq.s32.totalorder %s21, 1
      %p144 = por %p142, %p143
      %p145 = scmp.ne.s32.totalorder %s136, %s137
      %p146 = scmp.eq.s32.totalorder %s21, 0
      %p147 = por %p145, %p146
      %p148 = scmp.ne.s32.totalorder %s136, %s137
      %p149 = scmp.eq.s32.totalorder %s22, 1
      %p150 = por %p148, %p149
      %p152 = scmp.ne.s32.totalorder %s137, %s151
      %p153 = scmp.eq.s32.totalorder %s22, 0
      %p154 = por %p152, %p153
      %s156 = sadd.s32 %s155, 1
      %p159 = scmp.eq.s32.totalorder %s16, 1
      %p160 = scmp.ne.s32.totalorder %s155, %s157
      %p161 = scmp.eq.s32.totalorder %s16, 0
      %p162 = por %p160, %p161
      %p163 = scmp.ne.s32.totalorder %s155, %s157
      %p164 = scmp.eq.s32.totalorder %s21, 1
      %p165 = por %p163, %p164
      %p166 = scmp.ne.s32.totalorder %s157, %s158
      %p167 = scmp.eq.s32.totalorder %s21, 0
      %p168 = por %p166, %p167
      %p169 = scmp.ne.s32.totalorder %s157, %s158
      %p170 = scmp.eq.s32.totalorder %s22, 1
      %p171 = por %p169, %p170
      %p173 = scmp.ne.s32.totalorder %s158, %s172
      %p174 = scmp.eq.s32.totalorder %s22, 0
      %p175 = por %p173, %p174
      %s176 = ssub.s32 %s16, %s23
      %p177 = scmp.eq.s32.totalorder %s176, 0
      %s179 = sadd.s32 %s178, 1
      %s180 = scalar_select %p177, %s178, %s179
      %p183 = pneg %p177
      %p184 = scmp.eq.s32.totalorder %s16, 1
      %p185 = por %p183, %p184
      %p186 = scmp.ne.s32.totalorder %s178, %s181
      %p187 = scmp.eq.s32.totalorder %s16, 0
      %p188 = por %p186, %p187
      %p189 = scmp.ne.s32.totalorder %s178, %s181
      %p190 = scmp.eq.s32.totalorder %s21, 1
      %p191 = por %p189, %p190
      %p192 = scmp.ne.s32.totalorder %s181, %s182
      %p193 = scmp.eq.s32.totalorder %s21, 0
      %p194 = por %p192, %p193
      %p195 = scmp.ne.s32.totalorder %s181, %s182
      %p196 = scmp.eq.s32.totalorder %s22, 1
      %p197 = por %p195, %p196
      %p199 = scmp.ne.s32.totalorder %s182, %s198
      %p200 = scmp.eq.s32.totalorder %s22, 0
      %p201 = por %p199, %p200
      %p202 = scmp.le.s32.totalorder 1, %s16
      %p203 = scmp.lt.s32.totalorder %s16, 3
      %p204 = pnand %p202, %p203
      %p205 = pneg %p204
      // Predicated region
      $region9: #{tpu_custom_call.1} parent=5 // pred_check
        _
      $region10: #{tpu_custom_call.1} parent=5 // pred_check_branch
        %207 = sbr.rel (%p204) target = $region12
      $region11: #{tpu_custom_call.1} parent=5 // pred_region
        %s208 = ssub.s32 %s16, 1
        // Predicated region
        $region13: #{tpu_custom_call.1} parent=11 // pred_check
          %p209 = pneg %p63
        $region14: #{tpu_custom_call.1} parent=11 // pred_check_branch
          %211 = sbr.rel (%p209) target = $region16
        $region15: #{tpu_custom_call.1} parent=11 // pred_region
          _
        $region16: #{tpu_custom_call.1} parent=11 // pred_fallthru
          _
        // Predicated region
        $region17: #{tpu_custom_call.1} parent=11 // pred_check
          %p212 = pneg %p84
        $region18: #{tpu_custom_call.1} parent=11 // pred_check_branch
          %214 = sbr.rel (%p212) target = $region20
        $region19: #{tpu_custom_call.1} parent=11 // pred_region
          _
        $region20: #{tpu_custom_call.1} parent=11 // pred_fallthru
          _
        // Predicated region
        $region21: #{tpu_custom_call.1} parent=11 // pred_check
          %p215 = pneg %p105
        $region22: #{tpu_custom_call.1} parent=11 // pred_check_branch
          %217 = sbr.rel (%p215) target = $region24
        $region23: #{tpu_custom_call.1} parent=11 // pred_region
          _
        $region24: #{tpu_custom_call.1} parent=11 // pred_fallthru
          _
        // Predicated region
        $region25: #{tpu_custom_call.1} parent=11 // pred_check
          %p218 = pneg %p126
        $region26: #{tpu_custom_call.1} parent=11 // pred_check_branch
          %220 = sbr.rel (%p218) target = $region28
        $region27: #{tpu_custom_call.1} parent=11 // pred_region
          _
        $region28: #{tpu_custom_call.1} parent=11 // pred_fallthru
          _
        // Predicated region
        $region29: #{tpu_custom_call.1} parent=11 // pred_check
          %p221 = pneg %p147
        $region30: #{tpu_custom_call.1} parent=11 // pred_check_branch
          %223 = sbr.rel (%p221) target = $region32
        $region31: #{tpu_custom_call.1} parent=11 // pred_region
          _
        $region32: #{tpu_custom_call.1} parent=11 // pred_fallthru
          _
        // Predicated region
        $region33: #{tpu_custom_call.1} parent=11 // pred_check
          %p224 = pneg %p168
        $region34: #{tpu_custom_call.1} parent=11 // pred_check_branch
          %226 = sbr.rel (%p224) target = $region36
        $region35: #{tpu_custom_call.1} parent=11 // pred_region
          _
        $region36: #{tpu_custom_call.1} parent=11 // pred_fallthru
          _
      $region12: #{tpu_custom_call.1} parent=5 // pred_fallthru
        _
      %p227 = scmp.lt.s32.totalorder %s16, 2
      // Predicated region
      $region37: #{tpu_custom_call.1} parent=5 // pred_check
        %p228 = pneg %p227
      $region38: #{tpu_custom_call.1} parent=5 // pred_check_branch
        %230 = sbr.rel (%p228) target = $region40
      $region39: #{tpu_custom_call.1} parent=5 // pred_region
        // Predicated region
        $region41: #{tpu_custom_call.1} parent=39 // pred_check
          %p231 = pneg %p36
        $region42: #{tpu_custom_call.1} parent=39 // pred_check_branch
          %233 = sbr.rel (%p231) target = $region44
        $region43: #{tpu_custom_call.1} parent=39 // pred_region
          %s234 = smul.u32 4, %s16
          %p235 = scmp.lt.s32.totalorder %s234, 7
          %s236 = scalar_select %p235, %s234, 7
          %s237 = smul.addr %s236, 8
          %s238 = scalar_lea.vmem %s0, %s237
          %s239 = smul.u32 4, %s16
        $region44: #{tpu_custom_call.1} parent=39 // pred_fallthru
          _
      $region40: #{tpu_custom_call.1} parent=5 // pred_fallthru
        _
      %p240 = scmp.le.s32.totalorder 1, %s16
      %p241 = scmp.lt.s32.totalorder %s16, 3
      %p242 = pnand %p240, %p241
      %p243 = pneg %p242
      // Predicated region
      $region45: #{tpu_custom_call.1} parent=5 // pred_check
        _
      $region46: #{tpu_custom_call.1} parent=5 // pred_check_branch
        %245 = sbr.rel (%p242) target = $region48
      $region47: #{tpu_custom_call.1} parent=5 // pred_region
        %s246 = ssub.s32 %s16, 1
        %s247 = smul.u32 4, %s21
        %p248 = scmp.lt.s32.totalorder %s247, 7
        %s249 = scalar_select %p248, %s247, 7
        %s250 = smul.addr %s249, 8
        %s251 = scalar_lea.vmem %s0, %s250
        %p252 = pneg %p42
        %p253 = pneg %p39
        %p254 = pneg %p63
        %p255 = pneg %p60
        %p256 = pneg %p84
        %p257 = pneg %p81
        %p258 = pneg %p105
        %p259 = pneg %p102
        %p260 = pneg %p126
        %p261 = pneg %p123
        %p262 = pneg %p147
        %p263 = pneg %p144
        %p264 = pneg %p168
        %p265 = pneg %p165
        %p266 = pneg %p194
        %p267 = pneg %p191
        %s268 = sand.u32 %s181, 1
        %s269 = scalar_lea.sflag [#allocation3], %s268
        %s270 = sand.u32 %s181, 1
        %s271 = smul.addr %s270, 16
        %s272 = scalar_lea.vmem [#allocation2], %s271
        %s273 = smul.u32 4, %s21
        %p274 = scmp.lt.s32.totalorder %s273, 7
        %s275 = scalar_select %p274, %s273, 7
        %s276 = smul.addr %s275, 8
        %s277 = scalar_lea.vmem %s0, %s276
        %s278 = smul.u32 4, %s21
        %s279 = smul.u32 4, %s21
        %v281 = vld [vmem:[%s277] sm:$0xff]
        %v282 = vld [vmem:[%s277 + $0x8] sm:$0xff]
        %v283 = vld [vmem:[%s277 + $0x10] sm:$0xff]
        %v284 = vld [vmem:[%s277 + $0x18] sm:$0xff]
        %v285 = vpack.c.bf16 %v282, %v281
        %v286 = vpack.c.bf16 %v284, %v283
        %v287 = vld [vmem:[%s1] sm:$0xf]
        %v288 = vld [vmem:[%s1 + $0x4] sm:$0xf]
        %v289 = vld [vmem:[%s1 + $0x8] sm:$0xf]
        %v290 = vld [vmem:[%s1 + $0xc] sm:$0xf]
        %v291 = vld [vmem:[%s2] sm:$0x1]
        %v293 = vlaneseq
        %v294 = vshrl.u32 %v293, 7
        %v295 = vsub.s32 0, %v294
        %v296 = vrot.slane %v291, %v295
        %v302 = vunpack.c.l.b16 %v287
        %v303 = vunpack.c.l.b16 %v288
        %v304 = vunpack.c.l.b16 %v289
        %v305 = vunpack.c.l.b16 %v290
        %v306 = vpack.c.b16 %v303, %v302
        %v307 = vpack.c.b16 %v305, %v304
        %vm310 = vcmask 261120
        %v312 = vsel %vm310, %v285, 0
        %v315 = vsel %vm310, %v286, 0
        %317 = vmatprep.subr.bf16.mxu0 0
        %318 = vmatpush1.bf16.msra.mxu0 0
        %319 = vmatprep.subr.bf16.mxu0 0
        %320 = vmatpush1.bf16.msra.mxu0 0
        %321 = vmatprep.subr.bf16.mxu0 0
        %322 = vmatpush1.bf16.msra.mxu0 0
        %323 = vmatprep.subr.bf16.mxu0 0
        %324 = vmatpush1.bf16.msra.mxu0 0
        %325 = vmatprep.subr.bf16.mxu0 0
        %326 = vmatpush1.bf16.msra.mxu0 0
        %327 = vmatprep.subr.bf16.mxu0 0
        %328 = vmatpush1.bf16.msra.mxu0 0
        %329 = vmatprep.subr.bf16.mxu0 0
        %330 = vmatpush1.bf16.msra.mxu0 %v307
        %331 = vmatprep.subr.bf16.mxu0 0
        %332 = vmatpush1.bf16.msra.mxu0 %v306
        %333 = vmatprep.subr.bf16.mxu0 0
        %334 = vmatpush2.bf16.msra.mxu0 0
        %335 = vmatprep.subr.bf16.mxu0 0
        %336 = vmatpush2.bf16.msra.mxu0 0
        %337 = vmatprep.subr.bf16.mxu0 0
        %338 = vmatpush2.bf16.msra.mxu0 0
        %339 = vmatprep.subr.bf16.mxu0 0
        %340 = vmatpush2.bf16.msra.mxu0 0
        %341 = vmatprep.subr.bf16.mxu0 0
        %342 = vmatpush2.bf16.msra.mxu0 0
        %343 = vmatprep.subr.bf16.mxu0 0
        %344 = vmatpush2.bf16.msra.mxu0 0
        %345 = vmatprep.subr.bf16.mxu0 0
        %346 = vmatpush2.bf16.msra.mxu0 0
        %347 = vmatprep.subr.bf16.mxu0 0
        %348 = vmatpush2.bf16.msra.mxu0 0
        %349 = vmatprep.mubr.bf16.mxu0 0
        %350 = vmatmul.mubr.bf16.gmra.mxu0 %v312
        %v351 = vpop.f32.mrf.mxu0
        %v352 = vadd.f32 %v296, %v351
        %v353 = vpop.f32.mrf.mxu0
        %v354 = vpop.f32.mrf.mxu0
        %v355 = vadd.f32 %v296, %v354
        %v356 = vpop.f32.mrf.mxu0
        %357 = vmatprep.mubr.bf16.mxu0 0
        %358 = vmatmul.mubr.bf16.gmra.mxu0 %v315
        %v359 = vpop.f32.mrf.mxu0
        %v360 = vadd.f32 %v296, %v359
        %v361 = vpop.f32.mrf.mxu0
        %v362 = vpop.f32.mrf.mxu0
        %v363 = vadd.f32 %v296, %v362
        %v364 = vpop.f32.mrf.mxu0
        %365 = vdwg.mxu0
        %v366 = vmul.f32 %v352, 0.01
        %v367 = vmul.f32 %v355, 0.01
        %v368 = vmul.f32 %v360, 0.01
        %v369 = vmul.f32 %v363, 0.01
        %v370 = vmax.f32 %v352, %v366
        %v371 = vmax.f32 %v355, %v367
        %v372 = vmax.f32 %v360, %v368
        %v373 = vmax.f32 %v363, %v369
        %v374 = vpack.c.bf16 %v371, %v370
        %v375 = vpack.c.bf16 %v373, %v372
        %v376 = vld [vmem:[%s3] sm:$0xf]
        %v377 = vld [vmem:[%s3 + $0x4] sm:$0xf]
        %v378 = vld [vmem:[%s3 + $0x8] sm:$0xf]
        %v379 = vld [vmem:[%s3 + $0xc] sm:$0xf]
        %v380 = vld [vmem:[%s3 + $0x10] sm:$0xf]
        %v381 = vld [vmem:[%s3 + $0x14] sm:$0xf]
        %v382 = vld [vmem:[%s3 + $0x18] sm:$0xf]
        %v383 = vld [vmem:[%s3 + $0x1c] sm:$0xf]
        %v384 = vld [vmem:[%s4] sm:$0x1]
        %v386 = vlaneseq
        %v387 = vshrl.u32 %v386, 7
        %v388 = vsub.s32 0, %v387
        %v389 = vrot.slane %v384, %v388
        %v399 = vunpack.c.l.b16 %v376
        %v400 = vunpack.c.l.b16 %v377
        %v401 = vunpack.c.l.b16 %v378
        %v402 = vunpack.c.l.b16 %v379
        %v403 = vunpack.c.l.b16 %v380
        %v404 = vunpack.c.l.b16 %v381
        %v405 = vunpack.c.l.b16 %v382
        %v406 = vunpack.c.l.b16 %v383
        %v407 = vpack.c.b16 %v400, %v399
        %v408 = vpack.c.b16 %v402, %v401
        %v409 = vpack.c.b16 %v404, %v403
        %v410 = vpack.c.b16 %v406, %v405
        %vm415 = vcmask 523264
        %v417 = vsel %vm415, %v374, 0
        %v420 = vsel %vm415, %v375, 0
        %422 = vmatprep.subr.bf16.mxu0 0
        %423 = vmatpush1.bf16.msra.mxu0 0
        %424 = vmatprep.subr.bf16.mxu0 0
        %425 = vmatpush1.bf16.msra.mxu0 0
        %426 = vmatprep.subr.bf16.mxu0 0
        %427 = vmatpush1.bf16.msra.mxu0 0
        %428 = vmatprep.subr.bf16.mxu0 0
        %429 = vmatpush1.bf16.msra.mxu0 0
        %430 = vmatprep.subr.bf16.mxu0 0
        %431 = vmatpush1.bf16.msra.mxu0 %v410
        %432 = vmatprep.subr.bf16.mxu0 0
        %433 = vmatpush1.bf16.msra.mxu0 %v409
        %434 = vmatprep.subr.bf16.mxu0 0
        %435 = vmatpush1.bf16.msra.mxu0 %v408
        %436 = vmatprep.subr.bf16.mxu0 0
        %437 = vmatpush1.bf16.msra.mxu0 %v407
        %438 = vmatprep.subr.bf16.mxu0 0
        %439 = vmatpush2.bf16.msra.mxu0 0
        %440 = vmatprep.subr.bf16.mxu0 0
        %441 = vmatpush2.bf16.msra.mxu0 0
        %442 = vmatprep.subr.bf16.mxu0 0
        %443 = vmatpush2.bf16.msra.mxu0 0
        %444 = vmatprep.subr.bf16.mxu0 0
        %445 = vmatpush2.bf16.msra.mxu0 0
        %446 = vmatprep.subr.bf16.mxu0 0
        %447 = vmatpush2.bf16.msra.mxu0 0
        %448 = vmatprep.subr.bf16.mxu0 0
        %449 = vmatpush2.bf16.msra.mxu0 0
        %450 = vmatprep.subr.bf16.mxu0 0
        %451 = vmatpush2.bf16.msra.mxu0 0
        %452 = vmatprep.subr.bf16.mxu0 0
        %453 = vmatpush2.bf16.msra.mxu0 0
        %454 = vmatprep.mubr.bf16.mxu0 0
        %455 = vmatmul.mubr.bf16.gmra.mxu0 %v417
        %v456 = vpop.f32.mrf.mxu0
        %v457 = vadd.f32 %v389, %v456
        %v458 = vpop.f32.mrf.mxu0
        %v459 = vpop.f32.mrf.mxu0
        %v460 = vadd.f32 %v389, %v459
        %v461 = vpop.f32.mrf.mxu0
        %462 = vmatprep.mubr.bf16.mxu0 0
        %463 = vmatmul.mubr.bf16.gmra.mxu0 %v420
        %v464 = vpop.f32.mrf.mxu0
        %v465 = vadd.f32 %v389, %v464
        %v466 = vpop.f32.mrf.mxu0
        %v467 = vpop.f32.mrf.mxu0
        %v468 = vadd.f32 %v389, %v467
        %v469 = vpop.f32.mrf.mxu0
        %470 = vdwg.mxu0
        %v471 = vmul.f32 %v457, 0.01
        %v472 = vmul.f32 %v460, 0.01
        %v473 = vmul.f32 %v465, 0.01
        %v474 = vmul.f32 %v468, 0.01
        %v475 = vmax.f32 %v457, %v471
        %v476 = vmax.f32 %v460, %v472
        %v477 = vmax.f32 %v465, %v473
        %v478 = vmax.f32 %v468, %v474
        %v479 = vpack.c.bf16 %v476, %v475
        %v480 = vpack.c.bf16 %v478, %v477
        %v481 = vld [vmem:[%s5] sm:$0xf]
        %v482 = vld [vmem:[%s5 + $0x4] sm:$0xf]
        %v483 = vld [vmem:[%s5 + $0x8] sm:$0xf]
        %v484 = vld [vmem:[%s5 + $0xc] sm:$0xf]
        %v485 = vld [vmem:[%s6] sm:$0x1]
        %v487 = vlaneseq
        %v488 = vshrl.u32 %v487, 7
        %v489 = vsub.s32 0, %v488
        %v490 = vrot.slane %v485, %v489
        %v496 = vunpack.c.l.b16 %v481
        %v497 = vunpack.c.l.b16 %v482
        %v498 = vunpack.c.l.b16 %v483
        %v499 = vunpack.c.l.b16 %v484
        %v500 = vpack.c.b16 %v497, %v496
        %v501 = vpack.c.b16 %v499, %v498
        %v505 = vsel %vm310, %v479, 0
        %v508 = vsel %vm310, %v480, 0
        %510 = vmatprep.subr.bf16.mxu0 0
        %511 = vmatpush1.bf16.msra.mxu0 0
        %512 = vmatprep.subr.bf16.mxu0 0
        %513 = vmatpush1.bf16.msra.mxu0 0
        %514 = vmatprep.subr.bf16.mxu0 0
        %515 = vmatpush1.bf16.msra.mxu0 0
        %516 = vmatprep.subr.bf16.mxu0 0
        %517 = vmatpush1.bf16.msra.mxu0 0
        %518 = vmatprep.subr.bf16.mxu0 0
        %519 = vmatpush1.bf16.msra.mxu0 0
        %520 = vmatprep.subr.bf16.mxu0 0
        %521 = vmatpush1.bf16.msra.mxu0 0
        %522 = vmatprep.subr.bf16.mxu0 0
        %523 = vmatpush1.bf16.msra.mxu0 %v501
        %524 = vmatprep.subr.bf16.mxu0 0
        %525 = vmatpush1.bf16.msra.mxu0 %v500
        %526 = vmatprep.subr.bf16.mxu0 0
        %527 = vmatpush2.bf16.msra.mxu0 0
        %528 = vmatprep.subr.bf16.mxu0 0
        %529 = vmatpush2.bf16.msra.mxu0 0
        %530 = vmatprep.subr.bf16.mxu0 0
        %531 = vmatpush2.bf16.msra.mxu0 0
        %532 = vmatprep.subr.bf16.mxu0 0
        %533 = vmatpush2.bf16.msra.mxu0 0
        %534 = vmatprep.subr.bf16.mxu0 0
        %535 = vmatpush2.bf16.msra.mxu0 0
        %536 = vmatprep.subr.bf16.mxu0 0
        %537 = vmatpush2.bf16.msra.mxu0 0
        %538 = vmatprep.subr.bf16.mxu0 0
        %539 = vmatpush2.bf16.msra.mxu0 0
        %540 = vmatprep.subr.bf16.mxu0 0
        %541 = vmatpush2.bf16.msra.mxu0 0
        %542 = vmatprep.mubr.bf16.mxu0 0
        %543 = vmatmul.mubr.bf16.gmra.mxu0 %v505
        %v544 = vpop.f32.mrf.mxu0
        %v545 = vadd.f32 %v490, %v544
        %v546 = vpop.f32.mrf.mxu0
        %v547 = vpop.f32.mrf.mxu0
        %v548 = vadd.f32 %v490, %v547
        %v549 = vpop.f32.mrf.mxu0
        %550 = vmatprep.mubr.bf16.mxu0 0
        %551 = vmatmul.mubr.bf16.gmra.mxu0 %v508
        %v552 = vpop.f32.mrf.mxu0
        %v553 = vadd.f32 %v490, %v552
        %v554 = vpop.f32.mrf.mxu0
        %v555 = vpop.f32.mrf.mxu0
        %v556 = vadd.f32 %v490, %v555
        %v557 = vpop.f32.mrf.mxu0
        %558 = vdwg.mxu0
        %v559 = vxor.u32 %v545, 2147483648
        %v560 = vxor.u32 %v548, 2147483648
        %v561 = vxor.u32 %v553, 2147483648
        %v562 = vxor.u32 %v556, 2147483648
        %v563 = vmul.f32 %v559, 1.442695
        %v564 = vpow.pop %v563
        %v565 = vmul.f32 %v560, 1.442695
        %v566 = vpow.pop %v565
        %v567 = vmul.f32 %v561, 1.442695
        %v568 = vpow.pop %v567
        %v569 = vmul.f32 %v562, 1.442695
        %v570 = vpow.pop %v569
        %v571 = vadd.f32 %v564, 1.0
        %v572 = vadd.f32 %v566, 1.0
        %v573 = vadd.f32 %v568, 1.0
        %v574 = vadd.f32 %v570, 1.0
        %v575 = vrcp.pop %v571
        %v576 = vmul.f32 1.0, %v575
        %v577 = vrcp.pop %v572
        %v578 = vmul.f32 1.0, %v577
        %v579 = vrcp.pop %v573
        %v580 = vmul.f32 1.0, %v579
        %v581 = vrcp.pop %v574
        %v582 = vmul.f32 1.0, %v581
        %v583 = vpack.c.bf16 %v578, %v576
        %v584 = vpack.c.bf16 %v582, %v580
        %v587 = vunpack.c.l.b16 %v583
        %v588 = vunpack.c.h.b16 %v583
        %v589 = vunpack.c.l.b16 %v584
        %v590 = vunpack.c.h.b16 %v584
        %v591 = vpack.c.b16 %v587, %v587
        %v592 = vpack.c.b16 %v588, %v588
        %v593 = vpack.c.b16 %v589, %v589
        %v594 = vpack.c.b16 %v590, %v590
        %599 = vst [vmem:[%s272] sm:$0xf] %v591
        %600 = vst [vmem:[%s272 + $0x4] sm:$0xf] %v592
        %601 = vst [vmem:[%s272 + $0x8] sm:$0xf] %v593
        %602 = vst [vmem:[%s272 + $0xc] sm:$0xf] %v594
        %s603 = sand.u32 %s181, 1
        %s604 = scalar_lea.sflag [#allocation3], %s603
        %s605 = sand.u32 %s181, 1
        %s606 = smul.addr %s605, 16
        %s607 = scalar_lea.vmem [#allocation2], %s606
        // Predicated region
        $region49: #{tpu_custom_call.1} parent=47 // pred_check
          %p608 = pneg %p191
        $region50: #{tpu_custom_call.1} parent=47 // pred_check_branch
          %610 = sbr.rel (%p608) target = $region52
        $region51: #{tpu_custom_call.1} parent=47 // pred_region
          %s611 = smul.u32 4, %s21
          %s613 = ssub.s32 256, 256
          %614 = vsyncadd %s604, %s613
          %s615 = smul.addr %s611, 64
          %s616 = scalar_lea.hbm %s7, %s615
          %s617 = sshll.u32 %s607, 4
          %s618 = int_to_ptr.vmem [resolvable:$true] %s617
          %623 = dma.vmem_to_hbm [thread:$0]  %s618, 256, %s616, %s604, 64, 64, 4
        $region52: #{tpu_custom_call.1} parent=47 // pred_fallthru
          _
      $region48: #{tpu_custom_call.1} parent=5 // pred_fallthru
        _
      %p624 = scmp.le.s32.totalorder 2, %s16
      // Predicated region
      $region53: #{tpu_custom_call.1} parent=5 // pred_check
        %p625 = pneg %p624
      $region54: #{tpu_custom_call.1} parent=5 // pred_check_branch
        %627 = sbr.rel (%p625) target = $region56
      $region55: #{tpu_custom_call.1} parent=5 // pred_region
        %s628 = ssub.s32 %s16, 2
        // Predicated region
        $region57: #{tpu_custom_call.1} parent=55 // pred_check
          %p629 = pneg %p197
        $region58: #{tpu_custom_call.1} parent=55 // pred_check_branch
          %631 = sbr.rel (%p629) target = $region60
        $region59: #{tpu_custom_call.1} parent=55 // pred_region
          %s632 = sand.u32 %s182, 1
          %s633 = scalar_lea.sflag [#allocation3], %s632
          %s634 = sand.u32 %s182, 1
          %s635 = smul.addr %s634, 16
          %s636 = scalar_lea.vmem [#allocation2], %s635
          %637 = dma.done %s633, 256
        $region60: #{tpu_custom_call.1} parent=55 // pred_fallthru
          _
      $region56: #{tpu_custom_call.1} parent=5 // pred_fallthru
        _
    $region6: #{tpu_custom_call.1} parent=1 // loop_footer
      %s20 = sadd.s32 1, %s16
    $region7: #{tpu_custom_call.1} parent=1 // loop_footer_branch
      %15 = sbr.rel target = $region3
    $region8: #{tpu_custom_call.1} parent=1 // loop_exit
      _
    %638 = vsyncpa [#allocation3], 1
    %s639 = scalar_lea.sflag [#allocation3], 1
    %640 = vsyncpa %s639, 1

</llo_original>
